<compile_context>
chip_gen: v6e
topology: v6e:2x2x1
jax: 0.10.0
libtpu: 0.0.40
codegen_flags: <defaults>
</compile_context>

<pallas_src>
import jax
import jax.numpy as jnp
from jax.experimental import pallas as pl
from jax.experimental.pallas import tpu as pltpu


def _round_up(x: int, m: int) -> int:
    return ((x + m - 1) // m) * m


def _mlp_kernel(x_ref, w1t_ref, b1_ref, w2t_ref, b2_ref, o_ref):
    # x_ref  : (IN, TM)   feature-major tile, rows on the lane axis
    # w1t_ref: (H, IN)    b1_ref: (H, 1)
    # w2t_ref: (1, H)     b2_ref: (1, 1)
    # o_ref  : (1, TM)    lane-dense output tile
    x = x_ref[...]
    # fc1 + ReLU  (f32 accumulate)
    h = jnp.dot(w1t_ref[...], x, preferred_element_type=jnp.float32) + b1_ref[...]
    h = jnp.maximum(h, 0.0)
    # fc2
    y = jnp.dot(w2t_ref[...], h, preferred_element_type=jnp.float32) + b2_ref[...]
    o_ref[...] = y.astype(o_ref.dtype)


def net_forward(x, w1, b1, w2, b2, *, tm_max=2048):
    """x: (..., IN) float32 -> (..., 1) float32, identical to Net.forward.

    w1: (IN, H), b1: (H,) or (1, H), w2: (H, 1), b2: (1,) or (1, 1).
    """
    lead_shape = x.shape[:-1]
    in_dim = x.shape[-1]
    hidden = w1.shape[-1]

    x2d = x.reshape(-1, in_dim).astype(jnp.float32)
    m = x2d.shape[0]

    # Tile size: lane axis (rows) must be a multiple of 128; keep it modest so
    # double-buffered tiles fit easily under v5e's 16 MiB / v7x's 32 MiB
    # default scoped VMEM (a (4, 2048) f32 tile is only ~64 KiB raw).
    m128 = _round_up(max(m, 1), 128)
    tm = min(tm_max, m128)
    m_pad = _round_up(max(m, 1), tm)

    # Feature-major slab, zero-padded rows (padding rows are sliced off below).
    xt = jnp.zeros((in_dim, m_pad), jnp.float32).at[:, :m].set(x2d.T)

    # Kernel-friendly weight layout (tiny transposes done once in the wrapper).
    w1t = jnp.asarray(w1, jnp.float32).T.reshape(hidden, in_dim)   # (H, IN)
    b1c = jnp.asarray(b1, jnp.float32).reshape(hidden, 1)          # (H, 1)
    w2t = jnp.asarray(w2, jnp.float32).T.reshape(1, hidden)        # (1, H)
    b2c = jnp.asarray(b2, jnp.float32).reshape(1, 1)               # (1, 1)

    grid = (m_pad // tm,)

    cost = pl.CostEstimate(
        flops=2 * m_pad * (in_dim * hidden + hidden),
        transcendentals=0,
        bytes_accessed=(in_dim + 1) * m_pad * 4,
    )

    out = pl.pallas_call(
        _mlp_kernel,
        out_shape=jax.ShapeDtypeStruct((1, m_pad), jnp.float32),
        grid=grid,
        in_specs=[
            pl.BlockSpec((in_dim, tm), lambda i: (0, i)),   # x tile, rows on lanes
            pl.BlockSpec(w1t.shape, lambda i: (0, 0)),      # weights stay resident
            pl.BlockSpec(b1c.shape, lambda i: (0, 0)),
            pl.BlockSpec(w2t.shape, lambda i: (0, 0)),
            pl.BlockSpec(b2c.shape, lambda i: (0, 0)),
        ],
        out_specs=pl.BlockSpec((1, tm), lambda i: (0, i)),  # lane-dense output
        compiler_params=pltpu.CompilerParams(
            dimension_semantics=("parallel",),              # v7x: shard M across 2 TCs
        ),
        cost_estimate=cost,
    )(xt, w1t, b1c, w2t, b2c)

    return out[0, :m].reshape(*lead_shape, 1)


def init_params(key, input_size=4, hidden=16):
    """Deterministic init mimicking nn.Linear default (uniform +-1/sqrt(fan_in))."""
    k1, k2, k3, k4 = jax.random.split(key, 4)
    bound1 = 1.0 / jnp.sqrt(input_size)
    bound2 = 1.0 / jnp.sqrt(hidden)
    w1 = jax.random.uniform(k1, (input_size, hidden), jnp.float32, -bound1, bound1)
    b1 = jax.random.uniform(k2, (1, hidden), jnp.float32, -bound1, bound1)
    w2 = jax.random.uniform(k3, (hidden, 1), jnp.float32, -bound2, bound2)
    b2 = jax.random.uniform(k4, (1, 1), jnp.float32, -bound2, bound2)
    return w1, b1, w2, b2


if __name__ == "__main__":
    key = jax.random.PRNGKey(0)
    k_params, k_x = jax.random.split(key)

    INPUT_SIZE = 4     # Net(input_size=4)
    BATCH = 4          # small synthetic batch
    PARTICLES = 200    # matches particleLimit in the reference pipeline

    w1, b1, w2, b2 = init_params(k_params, input_size=INPUT_SIZE, hidden=16)
    x = jax.random.normal(k_x, (BATCH, PARTICLES, INPUT_SIZE), jnp.float32)

    # Use a small tile so the test exercises a multi-step grid (M=800 -> 4 tiles).
    y = net_forward(x, w1, b1, w2, b2, tm_max=256)
    y = jax.block_until_ready(y)

    # reference check in plain JAX
    ref = jnp.maximum(x.reshape(-1, INPUT_SIZE) @ w1 + b1, 0.0) @ w2 + b2
    ref = ref.reshape(BATCH, PARTICLES, 1)
    assert y.shape == (BATCH, PARTICLES, 1)
    assert jnp.allclose(y, ref, atol=1e-5, rtol=1e-5)

    print("KERNEL_OK")
</pallas_src>

<mosaic_0001>
module attributes {stable_mosaic.version = 11 : i64} {
  func.func @_mlp_kernel(%arg0: i32, %arg1: memref<4x256xf32, #tpu.memory_space<vmem>>, %arg2: memref<16x4xf32, #tpu.memory_space<vmem>>, %arg3: memref<16x1xf32, #tpu.memory_space<vmem>>, %arg4: memref<1x16xf32, #tpu.memory_space<vmem>>, %arg5: memref<1x1xf32, #tpu.memory_space<vmem>>, %arg6: memref<1x256xf32, #tpu.memory_space<vmem>>) attributes {dimension_semantics = [#tpu.dimension_semantics<parallel>], iteration_bounds = array<i64: 4>, scalar_prefetch = 0 : i64, scratch_operands = 0 : i64, tpu.core_type = #tpu.core_type<tc>, window_params = [{transform_indices = @transform_0, window_bounds = array<i64: 4, 256>}, {pipeline_mode = #tpu.pipeline_mode<synchronous>, transform_indices = @transform_1, window_bounds = array<i64: 16, 4>}, {pipeline_mode = #tpu.pipeline_mode<synchronous>, transform_indices = @transform_2, window_bounds = array<i64: 16, 1>}, {pipeline_mode = #tpu.pipeline_mode<synchronous>, transform_indices = @transform_3, window_bounds = array<i64: 1, 16>}, {pipeline_mode = #tpu.pipeline_mode<synchronous>, transform_indices = @transform_4, window_bounds = array<i64: 1, 1>}, {transform_indices = @transform_5, window_bounds = array<i64: 1, 256>}]} {
    %c0 = arith.constant 0 : index
    %c0_0 = arith.constant 0 : index
    %0 = vector.load %arg1[%c0, %c0_0] : memref<4x256xf32, #tpu.memory_space<vmem>>, vector<4x256xf32>
    %c0_1 = arith.constant 0 : index
    %c0_2 = arith.constant 0 : index
    %1 = vector.load %arg2[%c0_1, %c0_2] : memref<16x4xf32, #tpu.memory_space<vmem>>, vector<16x4xf32>
    %cst = arith.constant dense<0.000000e+00> : vector<16x256xf32>
    %2 = tpu.matmul %1, %0, %cst {dimension_numbers = #tpu.dot_dimension_numbers<[1], [0], [0], [1], [0, 0, 1, 1], [], []>} : vector<16x4xf32>, vector<4x256xf32>, vector<16x256xf32> -> vector<16x256xf32>
    %c0_3 = arith.constant 0 : index
    %c0_4 = arith.constant 0 : index
    %3 = vector.load %arg3[%c0_3, %c0_4] : memref<16x1xf32, #tpu.memory_space<vmem>>, vector<16x1xf32>
    %4 = vector.broadcast %3 : vector<16x1xf32> to vector<16x256xf32>
    %5 = arith.addf %2, %4 : vector<16x256xf32>
    %cst_5 = arith.constant 0.000000e+00 : f32
    %6 = vector.broadcast %cst_5 : f32 to vector<16x256xf32>
    %7 = arith.maximumf %5, %6 : vector<16x256xf32>
    %c0_6 = arith.constant 0 : index
    %c0_7 = arith.constant 0 : index
    %8 = vector.load %arg4[%c0_6, %c0_7] : memref<1x16xf32, #tpu.memory_space<vmem>>, vector<1x16xf32>
    %cst_8 = arith.constant dense<0.000000e+00> : vector<1x256xf32>
    %9 = tpu.matmul %8, %7, %cst_8 {dimension_numbers = #tpu.dot_dimension_numbers<[1], [0], [0], [1], [0, 0, 1, 1], [], []>} : vector<1x16xf32>, vector<16x256xf32>, vector<1x256xf32> -> vector<1x256xf32>
    %c0_9 = arith.constant 0 : index
    %c0_10 = arith.constant 0 : index
    %10 = vector.load %arg5[%c0_9, %c0_10] : memref<1x1xf32, #tpu.memory_space<vmem>>, vector<1x1xf32>
    %11 = vector.broadcast %10 : vector<1x1xf32> to vector<1x256xf32>
    %12 = arith.addf %9, %11 : vector<1x256xf32>
    %c0_11 = arith.constant 0 : index
    %c0_12 = arith.constant 0 : index
    %13 = vector.load %arg6[%c0_11, %c0_12] : memref<1x256xf32, #tpu.memory_space<vmem>>, vector<1x256xf32>
    tpu.vector_store %arg6[%c0_11, %c0_12], %12 {strides = array<i32>} : memref<1x256xf32, #tpu.memory_space<vmem>>, vector<1x256xf32>,
    return
  }
  func.func @transform_0(%arg0: i32) -> (i32, i32) {
    %c0_i32 = arith.constant 0 : i32
    %c0_i32_0 = arith.constant 0 : i32
    return %c0_i32, %arg0 : i32, i32
  }
  func.func @transform_1(%arg0: i32) -> (i32, i32) {
    %c0_i32 = arith.constant 0 : i32
    %c0_i32_0 = arith.constant 0 : i32
    %c0_i32_1 = arith.constant 0 : i32
    return %c0_i32, %c0_i32_0 : i32, i32
  }
  func.func @transform_2(%arg0: i32) -> (i32, i32) {
    %c0_i32 = arith.constant 0 : i32
    %c0_i32_0 = arith.constant 0 : i32
    %c0_i32_1 = arith.constant 0 : i32
    return %c0_i32, %c0_i32_0 : i32, i32
  }
  func.func @transform_3(%arg0: i32) -> (i32, i32) {
    %c0_i32 = arith.constant 0 : i32
    %c0_i32_0 = arith.constant 0 : i32
    %c0_i32_1 = arith.constant 0 : i32
    return %c0_i32, %c0_i32_0 : i32, i32
  }
  func.func @transform_4(%arg0: i32) -> (i32, i32) {
    %c0_i32 = arith.constant 0 : i32
    %c0_i32_0 = arith.constant 0 : i32
    %c0_i32_1 = arith.constant 0 : i32
    return %c0_i32, %c0_i32_0 : i32, i32
  }
  func.func @transform_5(%arg0: i32) -> (i32, i32) {
    %c0_i32 = arith.constant 0 : i32
    %c0_i32_0 = arith.constant 0 : i32
    return %c0_i32, %arg0 : i32, i32
  }
}

</mosaic_0001>

<llo_original>
// kernel: tpu_custom_call.1
$region0: #{tpu_custom_call.1}
  #allocation0 [shape = 'u32[]', space=smem, size = 0x4, offset = 0x4, fixed_abs, tag = 'smem constant byte address 0x4 - core index']
  #allocation1 [shape = 'u32[144,128]{1,0:T(1,128)}', space=vmem, size = 0x12000, scoped, tag = 'internal scratch']
  #allocation2 [shape = 'f32[1,1]{1,0:T(1,128)S(1)}', space=vmem, size = 0x200, scoped, tag = 'scoped memory for tpu_custom_call.1']
  %s0 = inlined_call_operand.vmem [shape: f32[4,1024], index: 0, kind: input, shape index: {}]
  %s1 = inlined_call_operand.vmem [shape: f32[16,4], index: 1, kind: input, shape index: {}]
  %s2 = inlined_call_operand.vmem [shape: f32[16,1], index: 2, kind: input, shape index: {}]
  %s3 = inlined_call_operand.vmem [shape: f32[1,16], index: 3, kind: input, shape index: {}]
  %s4 = inlined_call_operand.<no memory space> [shape: f32[1,1], index: 4, kind: input, shape index: {}]
  %s5 = inlined_call_operand.hbm [shape: f32[1,1024], index: 5, kind: output, shape index: {}]
  %s6 = sld [smem:[#allocation0]]
  $region53: #{tpu_custom_call.1} parent=0
    _
  %s8 = ssub.s32 1, %s6
  %s9 = scalar_select 0, %s8, %s6
  %v10 = vstv %s4
  %11 = vst [vmem:[#allocation2] sm:$0x1] %v10
  $region1: #{tpu_custom_call.1} parent=0
    #allocation3 [shape = 'u8[2048]{0}', space=vmem, size = 0x800, scoped, tag = 'output window, operand 0']
    #allocation4 [shape = 's32[2]{0}', space=sflag, size = 0x8, scoped, tag = 'scoped memory for tpu_custom_call.1']
    %12 = vsyncpa [#allocation4], 0
    %s13 = scalar_lea.sflag [#allocation4], 1
    %14 = vsyncpa %s13, 0
    loop: start=0, step=1, limit=6
    $region2: #{tpu_custom_call.1} parent=1 // loop_pre_header
      _
    $region3: #{tpu_custom_call.1} parent=1 // loop_header
      %s16 = sphi 0, %s20
      %p17 = scmp.ge.s32.totalorder %s16, 6
      %s26 = sphi 0, %s28
      %s29 = sphi 0, %s26
      %s30 = sphi 0, %s29
      %s46 = sphi 0, %s30
      %s50 = sphi 0, %s50
      %s52 = sphi 0, %s50
      %s53 = sphi 0, %s52
      %s67 = sphi 0, %s53
      %s71 = sphi 0, %s71
      %s73 = sphi 0, %s71
      %s74 = sphi 0, %s73
      %s88 = sphi 0, %s74
      %s92 = sphi 0, %s92
      %s94 = sphi 0, %s92
      %s95 = sphi 0, %s94
      %s109 = sphi 0, %s95
      %s113 = sphi 0, %s113
      %s115 = sphi 0, %s113
      %s116 = sphi 0, %s115
      %s130 = sphi 0, %s116
      %s136 = sphi 0, %s138
      %s139 = sphi 0, %s136
      %s140 = sphi 0, %s139
      %s156 = sphi 0, %s140
    $region4: #{tpu_custom_call.1} parent=1 // loop_header_branch
      %19 = sbr.rel (%p17) target = $region8
    $region5: #{tpu_custom_call.1} parent=1 // loop_body
      %s21 = ssub.s32 %s16, 1
      %s22 = ssub.s32 %s16, 2
      %s23 = sadd.s32 %s16, 1
      %s24 = ssub.s32 %s16, %s23
      %p25 = scmp.eq.s32.totalorder %s24, 0
      %s27 = sadd.s32 %s26, 1
      %s28 = scalar_select %p25, %s26, %s27
      %p31 = pneg %p25
      %p32 = scmp.eq.s32.totalorder %s16, 3
      %p33 = por %p31, %p32
      %p34 = scmp.ne.s32.totalorder %s26, %s29
      %p35 = scmp.eq.s32.totalorder %s16, 0
      %p36 = por %p34, %p35
      %p37 = scmp.ne.s32.totalorder %s26, %s29
      %p38 = scmp.eq.s32.totalorder %s21, 3
      %p39 = por %p37, %p38
      %p40 = scmp.ne.s32.totalorder %s29, %s30
      %p41 = scmp.eq.s32.totalorder %s21, 0
      %p42 = por %p40, %p41
      %p43 = scmp.ne.s32.totalorder %s29, %s30
      %p44 = scmp.eq.s32.totalorder %s22, 3
      %p45 = por %p43, %p44
      %p47 = scmp.ne.s32.totalorder %s30, %s46
      %p48 = scmp.eq.s32.totalorder %s22, 0
      %p49 = por %p47, %p48
      %s51 = sadd.s32 %s50, 1
      %p54 = scmp.eq.s32.totalorder %s16, 3
      %p55 = scmp.ne.s32.totalorder %s50, %s52
      %p56 = scmp.eq.s32.totalorder %s16, 0
      %p57 = por %p55, %p56
      %p58 = scmp.ne.s32.totalorder %s50, %s52
      %p59 = scmp.eq.s32.totalorder %s21, 3
      %p60 = por %p58, %p59
      %p61 = scmp.ne.s32.totalorder %s52, %s53
      %p62 = scmp.eq.s32.totalorder %s21, 0
      %p63 = por %p61, %p62
      %p64 = scmp.ne.s32.totalorder %s52, %s53
      %p65 = scmp.eq.s32.totalorder %s22, 3
      %p66 = por %p64, %p65
      %p68 = scmp.ne.s32.totalorder %s53, %s67
      %p69 = scmp.eq.s32.totalorder %s22, 0
      %p70 = por %p68, %p69
      %s72 = sadd.s32 %s71, 1
      %p75 = scmp.eq.s32.totalorder %s16, 3
      %p76 = scmp.ne.s32.totalorder %s71, %s73
      %p77 = scmp.eq.s32.totalorder %s16, 0
      %p78 = por %p76, %p77
      %p79 = scmp.ne.s32.totalorder %s71, %s73
      %p80 = scmp.eq.s32.totalorder %s21, 3
      %p81 = por %p79, %p80
      %p82 = scmp.ne.s32.totalorder %s73, %s74
      %p83 = scmp.eq.s32.totalorder %s21, 0
      %p84 = por %p82, %p83
      %p85 = scmp.ne.s32.totalorder %s73, %s74
      %p86 = scmp.eq.s32.totalorder %s22, 3
      %p87 = por %p85, %p86
      %p89 = scmp.ne.s32.totalorder %s74, %s88
      %p90 = scmp.eq.s32.totalorder %s22, 0
      %p91 = por %p89, %p90
      %s93 = sadd.s32 %s92, 1
      %p96 = scmp.eq.s32.totalorder %s16, 3
      %p97 = scmp.ne.s32.totalorder %s92, %s94
      %p98 = scmp.eq.s32.totalorder %s16, 0
      %p99 = por %p97, %p98
      %p100 = scmp.ne.s32.totalorder %s92, %s94
      %p101 = scmp.eq.s32.totalorder %s21, 3
      %p102 = por %p100, %p101
      %p103 = scmp.ne.s32.totalorder %s94, %s95
      %p104 = scmp.eq.s32.totalorder %s21, 0
      %p105 = por %p103, %p104
      %p106 = scmp.ne.s32.totalorder %s94, %s95
      %p107 = scmp.eq.s32.totalorder %s22, 3
      %p108 = por %p106, %p107
      %p110 = scmp.ne.s32.totalorder %s95, %s109
      %p111 = scmp.eq.s32.totalorder %s22, 0
      %p112 = por %p110, %p111
      %s114 = sadd.s32 %s113, 1
      %p117 = scmp.eq.s32.totalorder %s16, 3
      %p118 = scmp.ne.s32.totalorder %s113, %s115
      %p119 = scmp.eq.s32.totalorder %s16, 0
      %p120 = por %p118, %p119
      %p121 = scmp.ne.s32.totalorder %s113, %s115
      %p122 = scmp.eq.s32.totalorder %s21, 3
      %p123 = por %p121, %p122
      %p124 = scmp.ne.s32.totalorder %s115, %s116
      %p125 = scmp.eq.s32.totalorder %s21, 0
      %p126 = por %p124, %p125
      %p127 = scmp.ne.s32.totalorder %s115, %s116
      %p128 = scmp.eq.s32.totalorder %s22, 3
      %p129 = por %p127, %p128
      %p131 = scmp.ne.s32.totalorder %s116, %s130
      %p132 = scmp.eq.s32.totalorder %s22, 0
      %p133 = por %p131, %p132
      %s134 = ssub.s32 %s16, %s23
      %p135 = scmp.eq.s32.totalorder %s134, 0
      %s137 = sadd.s32 %s136, 1
      %s138 = scalar_select %p135, %s136, %s137
      %p141 = pneg %p135
      %p142 = scmp.eq.s32.totalorder %s16, 3
      %p143 = por %p141, %p142
      %p144 = scmp.ne.s32.totalorder %s136, %s139
      %p145 = scmp.eq.s32.totalorder %s16, 0
      %p146 = por %p144, %p145
      %p147 = scmp.ne.s32.totalorder %s136, %s139
      %p148 = scmp.eq.s32.totalorder %s21, 3
      %p149 = por %p147, %p148
      %p150 = scmp.ne.s32.totalorder %s139, %s140
      %p151 = scmp.eq.s32.totalorder %s21, 0
      %p152 = por %p150, %p151
      %p153 = scmp.ne.s32.totalorder %s139, %s140
      %p154 = scmp.eq.s32.totalorder %s22, 3
      %p155 = por %p153, %p154
      %p157 = scmp.ne.s32.totalorder %s140, %s156
      %p158 = scmp.eq.s32.totalorder %s22, 0
      %p159 = por %p157, %p158
      %p160 = scmp.le.s32.totalorder 1, %s16
      %p161 = scmp.lt.s32.totalorder %s16, 5
      %p162 = pnand %p160, %p161
      %p163 = pneg %p162
      // Predicated region
      $region9: #{tpu_custom_call.1} parent=5 // pred_check
        _
      $region10: #{tpu_custom_call.1} parent=5 // pred_check_branch
        %165 = sbr.rel (%p162) target = $region12
      $region11: #{tpu_custom_call.1} parent=5 // pred_region
        %s166 = ssub.s32 %s16, 1
        // Predicated region
        $region13: #{tpu_custom_call.1} parent=11 // pred_check
          %p167 = pneg %p63
        $region14: #{tpu_custom_call.1} parent=11 // pred_check_branch
          %169 = sbr.rel (%p167) target = $region16
        $region15: #{tpu_custom_call.1} parent=11 // pred_region
          _
        $region16: #{tpu_custom_call.1} parent=11 // pred_fallthru
          _
        // Predicated region
        $region17: #{tpu_custom_call.1} parent=11 // pred_check
          %p170 = pneg %p84
        $region18: #{tpu_custom_call.1} parent=11 // pred_check_branch
          %172 = sbr.rel (%p170) target = $region20
        $region19: #{tpu_custom_call.1} parent=11 // pred_region
          _
        $region20: #{tpu_custom_call.1} parent=11 // pred_fallthru
          _
        // Predicated region
        $region21: #{tpu_custom_call.1} parent=11 // pred_check
          %p173 = pneg %p105
        $region22: #{tpu_custom_call.1} parent=11 // pred_check_branch
          %175 = sbr.rel (%p173) target = $region24
        $region23: #{tpu_custom_call.1} parent=11 // pred_region
          _
        $region24: #{tpu_custom_call.1} parent=11 // pred_fallthru
          _
        // Predicated region
        $region25: #{tpu_custom_call.1} parent=11 // pred_check
          %p176 = pneg %p126
        $region26: #{tpu_custom_call.1} parent=11 // pred_check_branch
          %178 = sbr.rel (%p176) target = $region28
        $region27: #{tpu_custom_call.1} parent=11 // pred_region
          _
        $region28: #{tpu_custom_call.1} parent=11 // pred_fallthru
          _
      $region12: #{tpu_custom_call.1} parent=5 // pred_fallthru
        _
      %p179 = scmp.lt.s32.totalorder %s16, 4
      // Predicated region
      $region29: #{tpu_custom_call.1} parent=5 // pred_check
        %p180 = pneg %p179
      $region30: #{tpu_custom_call.1} parent=5 // pred_check_branch
        %182 = sbr.rel (%p180) target = $region32
      $region31: #{tpu_custom_call.1} parent=5 // pred_region
        // Predicated region
        $region33: #{tpu_custom_call.1} parent=31 // pred_check
          %p183 = pneg %p36
        $region34: #{tpu_custom_call.1} parent=31 // pred_check_branch
          %185 = sbr.rel (%p183) target = $region36
        $region35: #{tpu_custom_call.1} parent=31 // pred_region
          %s186 = smul.u32 2, %s16
          %p187 = scmp.lt.s32.totalorder %s186, 7
          %s188 = scalar_select %p187, %s186, 7
          %s189 = smul.addr %s188, 4
          %s190 = scalar_lea.vmem %s0, %s189
          %s191 = smul.u32 2, %s16
        $region36: #{tpu_custom_call.1} parent=31 // pred_fallthru
          _
      $region32: #{tpu_custom_call.1} parent=5 // pred_fallthru
        _
      %p192 = scmp.le.s32.totalorder 1, %s16
      %p193 = scmp.lt.s32.totalorder %s16, 5
      %p194 = pnand %p192, %p193
      %p195 = pneg %p194
      // Predicated region
      $region37: #{tpu_custom_call.1} parent=5 // pred_check
        _
      $region38: #{tpu_custom_call.1} parent=5 // pred_check_branch
        %197 = sbr.rel (%p194) target = $region40
      $region39: #{tpu_custom_call.1} parent=5 // pred_region
        %s198 = ssub.s32 %s16, 1
        %s199 = smul.u32 2, %s21
        %p200 = scmp.lt.s32.totalorder %s199, 7
        %s201 = scalar_select %p200, %s199, 7
        %s202 = smul.addr %s201, 4
        %s203 = scalar_lea.vmem %s0, %s202
        %p204 = pneg %p42
        %p205 = pneg %p39
        %p206 = pneg %p63
        %p207 = pneg %p60
        %p208 = pneg %p84
        %p209 = pneg %p81
        %p210 = pneg %p105
        %p211 = pneg %p102
        %p212 = pneg %p126
        %p213 = pneg %p123
        %p214 = pneg %p152
        %p215 = pneg %p149
        %s216 = sand.u32 %s139, 1
        %s217 = scalar_lea.sflag [#allocation4], %s216
        %s218 = sand.u32 %s139, 1
        %s219 = smul.addr %s218, 2
        %s220 = scalar_lea.vmem [#allocation3], %s219
        %s221 = smul.u32 2, %s21
        %p222 = scmp.lt.s32.totalorder %s221, 7
        %s223 = scalar_select %p222, %s221, 7
        %s224 = smul.addr %s223, 4
        %s225 = scalar_lea.vmem %s0, %s224
        %s226 = smul.u32 2, %s21
        %s227 = smul.u32 2, %s21
        %v228 = vld [vmem:[%s225] sm:$0xff]
        %v229 = vld [vmem:[%s1] sm:$0xff]
        %v230 = vld [vmem:[%s1 + $0x8] sm:$0xff]
        %v231 = vld [vmem:[%s2] sm:$0xff]
        %v232 = vld [vmem:[%s2 + $0x8] sm:$0xff]
        %234 = vset.pattern.permute.xlu0 0
        %235 = vperm.xlu0 %234, %v231
        %v236 = vpop.permute.xlu0 %235
        %239 = vset.pattern.permute.xlu0 0
        %240 = vperm.xlu0 %239, %v232
        %v241 = vpop.permute.xlu0 %240
        %v244 = vcombine.high %v228, %v228
        %vm245 = vcmask 31744
        %v247 = vsel %vm245, %v229, 0
        %v250 = vsel %vm245, %v230, 0
        %vm252 = vcmask 1043456
        %v253 = vsel %vm252, %v228, 0
        %v255 = vsel %vm252, %v244, 0
        %257 = vmatprep.subr.mxu0 0.0
        %258 = vmatpush1.msra.mxu0 0.0
        %259 = vmatprep.subr.mxu0 0.0
        %260 = vmatpush1.msra.mxu0 0.0
        %261 = vmatprep.subr.mxu0 0.0
        %262 = vmatpush1.msra.mxu0 0.0
        %263 = vmatprep.subr.mxu0 0.0
        %264 = vmatpush1.msra.mxu0 0.0
        %265 = vmatprep.subr.mxu0 0.0
        %266 = vmatpush1.msra.mxu0 0.0
        %267 = vmatprep.subr.mxu0 0.0
        %268 = vmatpush1.msra.mxu0 0.0
        %269 = vmatprep.subr.mxu0 0.0
        %270 = vmatpush1.msra.mxu0 0.0
        %271 = vmatprep.subr.mxu0 0.0
        %272 = vmatpush1.msra.mxu0 0.0
        %273 = vmatprep.subr.mxu0 0.0
        %274 = vmatpush1.msra.mxu0 0.0
        %275 = vmatprep.subr.mxu0 0.0
        %276 = vmatpush1.msra.mxu0 0.0
        %277 = vmatprep.subr.mxu0 0.0
        %278 = vmatpush1.msra.mxu0 0.0
        %279 = vmatprep.subr.mxu0 0.0
        %280 = vmatpush1.msra.mxu0 0.0
        %281 = vmatprep.subr.mxu0 0.0
        %282 = vmatpush1.msra.mxu0 0.0
        %283 = vmatprep.subr.mxu0 0.0
        %284 = vmatpush1.msra.mxu0 0.0
        %285 = vmatprep.subr.mxu0 0.0
        %286 = vmatpush1.msra.mxu0 0.0
        %287 = vmatprep.subr.mxu0 %v255
        %288 = vmatpush1.msra.mxu0 %v253
        %289 = vmatprep.subr.mxu0 0.0
        %290 = vmatpush2.msra.mxu0 0.0
        %291 = vmatprep.subr.mxu0 0.0
        %292 = vmatpush2.msra.mxu0 0.0
        %293 = vmatprep.subr.mxu0 0.0
        %294 = vmatpush2.msra.mxu0 0.0
        %295 = vmatprep.subr.mxu0 0.0
        %296 = vmatpush2.msra.mxu0 0.0
        %297 = vmatprep.subr.mxu0 0.0
        %298 = vmatpush2.msra.mxu0 0.0
        %299 = vmatprep.subr.mxu0 0.0
        %300 = vmatpush2.msra.mxu0 0.0
        %301 = vmatprep.subr.mxu0 0.0
        %302 = vmatpush2.msra.mxu0 0.0
        %303 = vmatprep.subr.mxu0 0.0
        %304 = vmatpush2.msra.mxu0 0.0
        %305 = vmatprep.subr.mxu0 0.0
        %306 = vmatpush2.msra.mxu0 0.0
        %307 = vmatprep.subr.mxu0 0.0
        %308 = vmatpush2.msra.mxu0 0.0
        %309 = vmatprep.subr.mxu0 0.0
        %310 = vmatpush2.msra.mxu0 0.0
        %311 = vmatprep.subr.mxu0 0.0
        %312 = vmatpush2.msra.mxu0 0.0
        %313 = vmatprep.subr.mxu0 0.0
        %314 = vmatpush2.msra.mxu0 0.0
        %315 = vmatprep.subr.mxu0 0.0
        %316 = vmatpush2.msra.mxu0 0.0
        %317 = vmatprep.subr.mxu0 0.0
        %318 = vmatpush2.msra.mxu0 0.0
        %319 = vmatprep.subr.mxu0 0.0
        %320 = vmatpush2.msra.mxu0 0.0
        %321 = vmatprep.mubr.f32.mxu0 0.0
        %322 = vmatmul.mubr.f32.gmra.mxu0 %v247
        %v323 = vpop.f32.mrf.mxu0
        %v324 = vadd.f32 %v236, %v323
        %v325 = vpop.f32.mrf.mxu0
        %v326 = vadd.f32 %v236, %v325
        %327 = vmatprep.mubr.f32.mxu0 0.0
        %328 = vmatmul.mubr.f32.gmra.mxu0 %v250
        %v329 = vpop.f32.mrf.mxu0
        %v330 = vadd.f32 %v241, %v329
        %v331 = vpop.f32.mrf.mxu0
        %v332 = vadd.f32 %v241, %v331
        %333 = vdwg.mxu0
        %v334 = vmax.f32 %v324, 0.0
        %v335 = vmax.f32 %v326, 0.0
        %v336 = vmax.f32 %v330, 0.0
        %v337 = vmax.f32 %v332, 0.0
        %v338 = vld [vmem:[%s3] sm:$0x1]
        %v339 = vld [vmem:[#allocation2] sm:$0x1]
        %341 = vset.pattern.permute.xlu0 0
        %342 = vperm.xlu0 %341, %v339
        %v343 = vpop.permute.xlu0 %342
        %v345 = vlaneseq
        %v346 = vshrl.u32 %v345, 7
        %v347 = vsub.s32 0, %v346
        %v348 = vrot.slane %v343, %v347
        %vm349 = vcmask 130048
        %v351 = vsel %vm349, %v338, 0
        %353 = vmatprep.subr.mxu0 0.0
        %354 = vmatpush1.msra.mxu0 0.0
        %355 = vmatprep.subr.mxu0 0.0
        %356 = vmatpush1.msra.mxu0 0.0
        %357 = vmatprep.subr.mxu0 0.0
        %358 = vmatpush1.msra.mxu0 0.0
        %359 = vmatprep.subr.mxu0 0.0
        %360 = vmatpush1.msra.mxu0 0.0
        %361 = vmatprep.subr.mxu0 0.0
        %362 = vmatpush1.msra.mxu0 0.0
        %363 = vmatprep.subr.mxu0 0.0
        %364 = vmatpush1.msra.mxu0 0.0
        %365 = vmatprep.subr.mxu0 0.0
        %366 = vmatpush1.msra.mxu0 0.0
        %367 = vmatprep.subr.mxu0 0.0
        %368 = vmatpush1.msra.mxu0 0.0
        %369 = vmatprep.subr.mxu0 0.0
        %370 = vmatpush1.msra.mxu0 0.0
        %371 = vmatprep.subr.mxu0 0.0
        %372 = vmatpush1.msra.mxu0 0.0
        %373 = vmatprep.subr.mxu0 0.0
        %374 = vmatpush1.msra.mxu0 0.0
        %375 = vmatprep.subr.mxu0 0.0
        %376 = vmatpush1.msra.mxu0 0.0
        %377 = vmatprep.subr.mxu0 0.0
        %378 = vmatpush1.msra.mxu0 0.0
        %379 = vmatprep.subr.mxu0 0.0
        %380 = vmatpush1.msra.mxu0 0.0
        %381 = vmatprep.subr.mxu0 %v337
        %382 = vmatpush1.msra.mxu0 %v336
        %383 = vmatprep.subr.mxu0 %v335
        %384 = vmatpush1.msra.mxu0 %v334
        %385 = vmatprep.subr.mxu0 0.0
        %386 = vmatpush2.msra.mxu0 0.0
        %387 = vmatprep.subr.mxu0 0.0
        %388 = vmatpush2.msra.mxu0 0.0
        %389 = vmatprep.subr.mxu0 0.0
        %390 = vmatpush2.msra.mxu0 0.0
        %391 = vmatprep.subr.mxu0 0.0
        %392 = vmatpush2.msra.mxu0 0.0
        %393 = vmatprep.subr.mxu0 0.0
        %394 = vmatpush2.msra.mxu0 0.0
        %395 = vmatprep.subr.mxu0 0.0
        %396 = vmatpush2.msra.mxu0 0.0
        %397 = vmatprep.subr.mxu0 0.0
        %398 = vmatpush2.msra.mxu0 0.0
        %399 = vmatprep.subr.mxu0 0.0
        %400 = vmatpush2.msra.mxu0 0.0
        %401 = vmatprep.subr.mxu0 0.0
        %402 = vmatpush2.msra.mxu0 0.0
        %403 = vmatprep.subr.mxu0 0.0
        %404 = vmatpush2.msra.mxu0 0.0
        %405 = vmatprep.subr.mxu0 0.0
        %406 = vmatpush2.msra.mxu0 0.0
        %407 = vmatprep.subr.mxu0 0.0
        %408 = vmatpush2.msra.mxu0 0.0
        %409 = vmatprep.subr.mxu0 0.0
        %410 = vmatpush2.msra.mxu0 0.0
        %411 = vmatprep.subr.mxu0 0.0
        %412 = vmatpush2.msra.mxu0 0.0
        %413 = vmatprep.subr.mxu0 0.0
        %414 = vmatpush2.msra.mxu0 0.0
        %415 = vmatprep.subr.mxu0 0.0
        %416 = vmatpush2.msra.mxu0 0.0
        %417 = vmatprep.mubr.f32.mxu0 0.0
        %418 = vmatmul.mubr.f32.gmra.mxu0 %v351
        %v419 = vpop.f32.mrf.mxu0
        %v420 = vadd.f32 %v348, %v419
        %v421 = vpop.f32.mrf.mxu0
        %v422 = vadd.f32 %v348, %v421
        %423 = vdwg.mxu0
        %v426 = vcombine.low %v420, %v422
        %v428 = vunpack.c.l.s4 1966171168
        %v429 = vunpack.c.0.s8 %v428
        %v430 = vlaneseq
        %v431 = vshrl.u32 %v430, 7
        %v432 = vsub.s32 %v429, %v431
        %v433 = vrot.slane %v426, %v432
        %v435 = vunpack.c.l.s4 1966171168
        %v436 = vunpack.c.0.s8 %v435
        %v437 = vlaneseq
        %v438 = vshrl.u32 %v437, 7
        %v439 = vsub.s32 %v436, %v438
        %v440 = vrot.slane %v433, %v439
        %v442 = vlaneseq
        %vm443 = vcmp.ge.s32.totalorder %v442, 0
        %vm444 = vcmp.lt.s32.totalorder %v442, 256
        %vm445 = vmand %vm443, %vm444
        %446 = vst.msk [vmem:[%s220] sm:$0x3] %vm445, %v440
        %s447 = sand.u32 %s139, 1
        %s448 = scalar_lea.sflag [#allocation4], %s447
        %s449 = sand.u32 %s139, 1
        %s450 = smul.addr %s449, 2
        %s451 = scalar_lea.vmem [#allocation3], %s450
        // Predicated region
        $region41: #{tpu_custom_call.1} parent=39 // pred_check
          %p452 = pneg %p149
        $region42: #{tpu_custom_call.1} parent=39 // pred_check_branch
          %454 = sbr.rel (%p452) target = $region44
        $region43: #{tpu_custom_call.1} parent=39 // pred_region
          %s455 = smul.u32 2, %s21
          %s457 = ssub.s32 32, 32
          %458 = vsyncadd %s448, %s457
          %s459 = smul.addr %s455, 16
          %s460 = scalar_lea.hbm %s5, %s459
          %s462 = sshll.u32 %s451, 4
          %s463 = int_to_ptr.vmem [resolvable:$true] %s462
          %465 = dma.vmem_to_hbm [thread:$0]  %s463, 32, %s460, %s448
        $region44: #{tpu_custom_call.1} parent=39 // pred_fallthru
          _
      $region40: #{tpu_custom_call.1} parent=5 // pred_fallthru
        _
      %p466 = scmp.le.s32.totalorder 2, %s16
      // Predicated region
      $region45: #{tpu_custom_call.1} parent=5 // pred_check
        %p467 = pneg %p466
      $region46: #{tpu_custom_call.1} parent=5 // pred_check_branch
        %469 = sbr.rel (%p467) target = $region48
      $region47: #{tpu_custom_call.1} parent=5 // pred_region
        %s470 = ssub.s32 %s16, 2
        // Predicated region
        $region49: #{tpu_custom_call.1} parent=47 // pred_check
          %p471 = pneg %p155
        $region50: #{tpu_custom_call.1} parent=47 // pred_check_branch
          %473 = sbr.rel (%p471) target = $region52
        $region51: #{tpu_custom_call.1} parent=47 // pred_region
          %s474 = sand.u32 %s140, 1
          %s475 = scalar_lea.sflag [#allocation4], %s474
          %s476 = sand.u32 %s140, 1
          %s477 = smul.addr %s476, 2
          %s478 = scalar_lea.vmem [#allocation3], %s477
          %479 = dma.done %s475, 32
        $region52: #{tpu_custom_call.1} parent=47 // pred_fallthru
          _
      $region48: #{tpu_custom_call.1} parent=5 // pred_fallthru
        _
    $region6: #{tpu_custom_call.1} parent=1 // loop_footer
      %s20 = sadd.s32 1, %s16
    $region7: #{tpu_custom_call.1} parent=1 // loop_footer_branch
      %15 = sbr.rel target = $region3
    $region8: #{tpu_custom_call.1} parent=1 // loop_exit
      _
    %480 = vsyncpa [#allocation4], 1
    %s481 = scalar_lea.sflag [#allocation4], 1
    %482 = vsyncpa %s481, 1

</llo_original>
